<compile_context>
chip_gen: v7x
topology: tpu7x:2x2x1
jax: 0.10.0
libtpu: 0.0.40
codegen_flags: <defaults>
</compile_context>

<pallas_src>
import jax
import jax.numpy as jnp
from jax import lax
from jax.experimental import pallas as pl
from jax.experimental.pallas import tpu as pltpu

INPUT_DIM = 35
HIDDEN = 256


def _critic_kernel(x_ref, w1_ref, b1_ref, w2_ref, b2_ref, w3_ref, b3_ref, o_ref):
    # fc1 + relu: contract the feature axis of w1 (H, Dp) with the (minor)
    # feature axis of the x tile (tm, Dp) -> (H, tm).  Batch lands on lanes,
    # no transpose of x required; f32 accumulation on the MXU.
    x = x_ref[...]
    h = lax.dot_general(w1_ref[...], x,
                        (((1,), (1,)), ((), ())),
                        preferred_element_type=jnp.float32)
    h = jnp.maximum(h + b1_ref[...], 0.0)
    # fc2 + relu: (H, H) @ (H, tm) -> (H, tm).
    h = jnp.dot(w2_ref[...], h.astype(w2_ref.dtype),
                preferred_element_type=jnp.float32)
    h = jnp.maximum(h + b2_ref[...], 0.0)
    # fc_out (H -> 1) on VPU/XLU: scale rows by the w3 column, reduce over the
    # hidden (sublane) axis -> lane-dense (1, tm).  b3 is an SMEM scalar.
    out = jnp.sum(h * w3_ref[...], axis=0, keepdims=True) + b3_ref[0, 0]
    o_ref[...] = out.astype(o_ref.dtype)


def _choose_tile(B_pad, tm):
    """Largest multiple-of-128 divisor of B_pad that is <= tm; prefer >=2 grid
    steps (v7x has 2 TensorCores) when the batch allows it."""
    tm_cap = min(tm, B_pad)
    tm_eff = 128
    for cand in range(tm_cap, 127, -128):
        if B_pad % cand == 0:
            tm_eff = cand
            break
    if B_pad // tm_eff < 2 and B_pad >= 256:
        half = pl.cdiv(B_pad // 2, 128) * 128
        for cand in range(min(half, tm_cap), 127, -128):
            if B_pad % cand == 0:
                tm_eff = cand
                break
    return tm_eff


def skill_conditioned_critic(x, params, *, tm=1024, compute_dtype=jnp.bfloat16):
    """Fused forward pass of SkillConditionedCritic.

    x: (B, input_dim) float32.
    params: torch nn.Linear layout -- w: (out_features, in_features), b: (out_features,).
    Returns (B, 1) float32.  With the default bf16 operands, accuracy is
    ~3e-2 (f32 MXU accumulation); pass compute_dtype=jnp.float32 if needed.
    """
    w1, b1, w2, b2, w3, b3 = params
    B, D = x.shape
    H = w1.shape[0]
    assert w1.shape == (H, D) and w2.shape == (H, H) and w3.shape == (1, H)
    assert tm >= 128 and tm % 128 == 0

    # Pad batch to a multiple of 128 and the feature axis to a multiple of 16
    # (sublane-pack friendly; much smaller than 128 -> less x DMA).  Exact math.
    B_pad = pl.cdiv(B, 128) * 128
    D_pad = pl.cdiv(D, 16) * 16
    tm_eff = _choose_tile(B_pad, tm)
    B_pad = pl.cdiv(B_pad, tm_eff) * tm_eff  # no-op: tm_eff divides B_pad
    grid = (B_pad // tm_eff,)

    # Single fused pad+cast of x (natural layout -- no transpose).
    x_p = jnp.zeros((B_pad, D_pad), compute_dtype).at[:B, :D].set(
        x.astype(compute_dtype))

    w1c = jnp.zeros((H, D_pad), compute_dtype).at[:, :D].set(
        w1.astype(compute_dtype))
    w2c = w2.astype(compute_dtype)
    b1c = b1.reshape(H, 1).astype(jnp.float32)
    b2c = b2.reshape(H, 1).astype(jnp.float32)
    w3c = w3.reshape(H, 1).astype(jnp.float32)
    b3c = b3.reshape(1, 1).astype(jnp.float32)

    itemsize = jnp.dtype(compute_dtype).itemsize
    cost = pl.CostEstimate(
        flops=2 * B_pad * (D_pad * H + H * H + H),
        transcendentals=0,
        bytes_accessed=(B_pad * D_pad * itemsize            # x (streamed)
                        + (H * D_pad + H * H) * itemsize    # weights (once)
                        + (3 * H + 1) * 4                   # bias columns, w3, b3
                        + B_pad * 4),                       # output
    )

    out = pl.pallas_call(
        _critic_kernel,
        out_shape=jax.ShapeDtypeStruct((1, B_pad), jnp.float32),
        grid_spec=pltpu.PrefetchScalarGridSpec(
            num_scalar_prefetch=0,
            grid=grid,
            in_specs=[
                pl.BlockSpec((tm_eff, D_pad), lambda i: (i, 0)),    # x tile
                pl.BlockSpec((H, D_pad), lambda i: (0, 0)),         # w1
                pl.BlockSpec((H, 1), lambda i: (0, 0)),             # b1 column
                pl.BlockSpec((H, H), lambda i: (0, 0)),             # w2
                pl.BlockSpec((H, 1), lambda i: (0, 0)),             # b2 column
                pl.BlockSpec((H, 1), lambda i: (0, 0)),             # w3 column
                pl.BlockSpec(memory_space=pltpu.MemorySpace.SMEM),  # b3 scalar
            ],
            out_specs=pl.BlockSpec((1, tm_eff), lambda i: (0, i)),  # lane-dense
        ),
        compiler_params=pltpu.CompilerParams(
            dimension_semantics=("parallel",),
        ),
        cost_estimate=cost,
    )(x_p, w1c, b1c, w2c, b2c, w3c, b3c)

    return out[0, :B].reshape(B, 1)


def init_params(key, input_dim=INPUT_DIM, hidden=HIDDEN):
    """torch.nn.Linear default init (U[-1/sqrt(fan_in), 1/sqrt(fan_in)]),
    stored in torch layout: w (out_features, in_features), b (out_features,)."""
    ks = jax.random.split(key, 6)

    def lin(kw, kb, fan_in, fan_out):
        bound = 1.0 / jnp.sqrt(fan_in)
        w = jax.random.uniform(kw, (fan_out, fan_in), jnp.float32, -bound, bound)
        b = jax.random.uniform(kb, (fan_out,), jnp.float32, -bound, bound)
        return w, b

    w1, b1 = lin(ks[0], ks[1], input_dim, hidden)
    w2, b2 = lin(ks[2], ks[3], hidden, hidden)
    w3, b3 = lin(ks[4], ks[5], hidden, 1)
    return (w1, b1, w2, b2, w3, b3)


def reference_forward(x, params):
    w1, b1, w2, b2, w3, b3 = params
    h = jnp.maximum(x @ w1.T + b1, 0.0)
    h = jnp.maximum(h @ w2.T + b2, 0.0)
    return h @ w3.T + b3


if __name__ == "__main__":
    key = jax.random.PRNGKey(0)
    k_x, k_p, k_x2 = jax.random.split(key, 3)
    params = init_params(k_p)

    # Small batch (single grid step).
    B = 8
    x = jax.random.normal(k_x, (B, INPUT_DIM), jnp.float32)
    ref = reference_forward(x, params)
    out = jax.block_until_ready(skill_conditioned_critic(x, params))
    assert out.shape == (B, 1)
    assert jnp.allclose(out, ref, atol=3e-2, rtol=3e-2)

    # Ragged batch (exercises batch padding + multi-step grid / tile divisor).
    B2 = 260
    x2 = jax.random.normal(k_x2, (B2, INPUT_DIM), jnp.float32)
    ref2 = reference_forward(x2, params)
    out2 = jax.block_until_ready(skill_conditioned_critic(x2, params))
    assert out2.shape == (B2, 1)
    assert jnp.allclose(out2, ref2, atol=3e-2, rtol=3e-2)

    print("KERNEL_OK")
</pallas_src>

<mosaic_0001>
module attributes {stable_mosaic.version = 11 : i64} {
  func.func @_critic_kernel(%arg0: i32, %arg1: memref<128x48xbf16, #tpu.memory_space<vmem>>, %arg2: memref<256x48xbf16, #tpu.memory_space<vmem>>, %arg3: memref<256x1xf32, #tpu.memory_space<vmem>>, %arg4: memref<256x256xbf16, #tpu.memory_space<vmem>>, %arg5: memref<256x1xf32, #tpu.memory_space<vmem>>, %arg6: memref<256x1xf32, #tpu.memory_space<vmem>>, %arg7: memref<1x1xf32, #tpu.memory_space<smem>>, %arg8: memref<1x128xf32, #tpu.memory_space<vmem>>) attributes {dimension_semantics = [#tpu.dimension_semantics<parallel>], iteration_bounds = array<i64: 1>, scalar_prefetch = 0 : i64, scratch_operands = 0 : i64, tpu.core_type = #tpu.core_type<tc>, window_params = [{transform_indices = @transform_0, window_bounds = array<i64: 128, 48>}, {pipeline_mode = #tpu.pipeline_mode<synchronous>, transform_indices = @transform_1, window_bounds = array<i64: 256, 48>}, {pipeline_mode = #tpu.pipeline_mode<synchronous>, transform_indices = @transform_2, window_bounds = array<i64: 256, 1>}, {pipeline_mode = #tpu.pipeline_mode<synchronous>, transform_indices = @transform_3, window_bounds = array<i64: 256, 256>}, {pipeline_mode = #tpu.pipeline_mode<synchronous>, transform_indices = @transform_4, window_bounds = array<i64: 256, 1>}, {pipeline_mode = #tpu.pipeline_mode<synchronous>, transform_indices = @transform_5, window_bounds = array<i64: 256, 1>}, {transform_indices = @transform_6, window_bounds = array<i64: 1, 1>}, {transform_indices = @transform_7, window_bounds = array<i64: 1, 128>}]} {
    %c0 = arith.constant 0 : index
    %c0_0 = arith.constant 0 : index
    %0 = vector.load %arg1[%c0, %c0_0] : memref<128x48xbf16, #tpu.memory_space<vmem>>, vector<128x48xbf16>
    %c0_1 = arith.constant 0 : index
    %c0_2 = arith.constant 0 : index
    %1 = vector.load %arg2[%c0_1, %c0_2] : memref<256x48xbf16, #tpu.memory_space<vmem>>, vector<256x48xbf16>
    %cst = arith.constant dense<0.000000e+00> : vector<256x128xf32>
    %2 = tpu.matmul %1, %0, %cst {dimension_numbers = #tpu.dot_dimension_numbers<[1], [1], [0], [0], [0, 0, 1, 0], [], []>} : vector<256x48xbf16>, vector<128x48xbf16>, vector<256x128xf32> -> vector<256x128xf32>
    %c0_3 = arith.constant 0 : index
    %c0_4 = arith.constant 0 : index
    %3 = vector.load %arg3[%c0_3, %c0_4] : memref<256x1xf32, #tpu.memory_space<vmem>>, vector<256x1xf32>
    %4 = vector.broadcast %3 : vector<256x1xf32> to vector<256x128xf32>
    %5 = arith.addf %2, %4 : vector<256x128xf32>
    %cst_5 = arith.constant 0.000000e+00 : f32
    %6 = vector.broadcast %cst_5 : f32 to vector<256x128xf32>
    %7 = arith.maximumf %5, %6 : vector<256x128xf32>
    %c0_6 = arith.constant 0 : index
    %c0_7 = arith.constant 0 : index
    %8 = vector.load %arg4[%c0_6, %c0_7] : memref<256x256xbf16, #tpu.memory_space<vmem>>, vector<256x256xbf16>
    %9 = arith.truncf %7 : vector<256x128xf32> to vector<256x128xbf16>
    %cst_8 = arith.constant dense<0.000000e+00> : vector<256x128xf32>
    %10 = tpu.matmul %8, %9, %cst_8 {dimension_numbers = #tpu.dot_dimension_numbers<[1], [0], [0], [1], [0, 0, 1, 1], [], []>} : vector<256x256xbf16>, vector<256x128xbf16>, vector<256x128xf32> -> vector<256x128xf32>
    %c0_9 = arith.constant 0 : index
    %c0_10 = arith.constant 0 : index
    %11 = vector.load %arg5[%c0_9, %c0_10] : memref<256x1xf32, #tpu.memory_space<vmem>>, vector<256x1xf32>
    %12 = vector.broadcast %11 : vector<256x1xf32> to vector<256x128xf32>
    %13 = arith.addf %10, %12 : vector<256x128xf32>
    %cst_11 = arith.constant 0.000000e+00 : f32
    %14 = vector.broadcast %cst_11 : f32 to vector<256x128xf32>
    %15 = arith.maximumf %13, %14 : vector<256x128xf32>
    %c0_12 = arith.constant 0 : index
    %c0_13 = arith.constant 0 : index
    %16 = vector.load %arg6[%c0_12, %c0_13] : memref<256x1xf32, #tpu.memory_space<vmem>>, vector<256x1xf32>
    %17 = vector.broadcast %16 : vector<256x1xf32> to vector<256x128xf32>
    %18 = arith.mulf %15, %17 : vector<256x128xf32>
    %cst_14 = arith.constant dense<0.000000e+00> : vector<128xf32>
    %19 = vector.multi_reduction <add>, %18, %cst_14 [0] : vector<256x128xf32> to vector<128xf32>
    %20 = vector.shape_cast %19 : vector<128xf32> to vector<1x128xf32>
    %c0_15 = arith.constant 0 : index
    %c0_16 = arith.constant 0 : index
    %21 = memref.load %arg7[%c0_15, %c0_16] : memref<1x1xf32, #tpu.memory_space<smem>>
    %22 = vector.broadcast %21 : f32 to vector<1x128xf32>
    %23 = arith.addf %20, %22 : vector<1x128xf32>
    %c0_17 = arith.constant 0 : index
    %c0_18 = arith.constant 0 : index
    %24 = vector.load %arg8[%c0_17, %c0_18] : memref<1x128xf32, #tpu.memory_space<vmem>>, vector<1x128xf32>
    tpu.vector_store %arg8[%c0_17, %c0_18], %23 {strides = array<i32>} : memref<1x128xf32, #tpu.memory_space<vmem>>, vector<1x128xf32>,
    return
  }
  func.func @transform_0(%arg0: i32) -> (i32, i32) {
    %c0_i32 = arith.constant 0 : i32
    %c0_i32_0 = arith.constant 0 : i32
    return %arg0, %c0_i32 : i32, i32
  }
  func.func @transform_1(%arg0: i32) -> (i32, i32) {
    %c0_i32 = arith.constant 0 : i32
    %c0_i32_0 = arith.constant 0 : i32
    %c0_i32_1 = arith.constant 0 : i32
    return %c0_i32, %c0_i32_0 : i32, i32
  }
  func.func @transform_2(%arg0: i32) -> (i32, i32) {
    %c0_i32 = arith.constant 0 : i32
    %c0_i32_0 = arith.constant 0 : i32
    %c0_i32_1 = arith.constant 0 : i32
    return %c0_i32, %c0_i32_0 : i32, i32
  }
  func.func @transform_3(%arg0: i32) -> (i32, i32) {
    %c0_i32 = arith.constant 0 : i32
    %c0_i32_0 = arith.constant 0 : i32
    %c0_i32_1 = arith.constant 0 : i32
    return %c0_i32, %c0_i32_0 : i32, i32
  }
  func.func @transform_4(%arg0: i32) -> (i32, i32) {
    %c0_i32 = arith.constant 0 : i32
    %c0_i32_0 = arith.constant 0 : i32
    %c0_i32_1 = arith.constant 0 : i32
    return %c0_i32, %c0_i32_0 : i32, i32
  }
  func.func @transform_5(%arg0: i32) -> (i32, i32) {
    %c0_i32 = arith.constant 0 : i32
    %c0_i32_0 = arith.constant 0 : i32
    %c0_i32_1 = arith.constant 0 : i32
    return %c0_i32, %c0_i32_0 : i32, i32
  }
  func.func @transform_6(%arg0: i32) -> (i32, i32) {
    %c0_i32 = arith.constant 0 : i32
    %c0_i32_0 = arith.constant 0 : i32
    %c0_i32_1 = arith.constant 0 : i32
    return %c0_i32, %c0_i32_0 : i32, i32
  }
  func.func @transform_7(%arg0: i32) -> (i32, i32) {
    %c0_i32 = arith.constant 0 : i32
    %c0_i32_0 = arith.constant 0 : i32
    return %c0_i32, %arg0 : i32, i32
  }
}

</mosaic_0001>

<llo_original>
// kernel: tpu_custom_call.1
$region0: #{tpu_custom_call.1}
  #allocation0 [shape = 'u32[]', space=smem, size = 0x4, offset = 0x4, fixed_abs, tag = 'smem constant byte address 0x4 - core index']
  #allocation1 [shape = 'u32[144,128]{1,0:T(1,128)}', space=vmem, size = 0x12000, scoped, tag = 'internal scratch']
  #allocation2 [shape = 'f32[1,1]{1,0:T(1,128)S(6)}', space=smem, size = 0x200, scoped, tag = 'scoped memory for tpu_custom_call.1']
  %s0 = inlined_call_operand.vmem [shape: bf16[128,48], index: 0, kind: input, shape index: {}]
  %s1 = inlined_call_operand.vmem [shape: bf16[256,48], index: 1, kind: input, shape index: {}]
  %s2 = inlined_call_operand.vmem [shape: f32[256,1], index: 2, kind: input, shape index: {}]
  %s3 = inlined_call_operand.vmem [shape: bf16[256,256], index: 3, kind: input, shape index: {}]
  %s4 = inlined_call_operand.vmem [shape: f32[256,1], index: 4, kind: input, shape index: {}]
  %s5 = inlined_call_operand.vmem [shape: f32[256,1], index: 5, kind: input, shape index: {}]
  %s6 = inlined_call_operand.<no memory space> [shape: f32[1,1], index: 6, kind: input, shape index: {}]
  %s7 = inlined_call_operand.hbm [shape: f32[1,128], index: 7, kind: output, shape index: {}]
  %s8 = sld [smem:[#allocation0]]
  $region38: #{tpu_custom_call.1} parent=0
    _
  %s10 = ssub.s32 1, %s8
  %s11 = scalar_select 0, %s10, %s8
  %12 = sst [smem:[#allocation2]] %s6
  $region1: #{tpu_custom_call.1} parent=0
    #allocation3 [shape = 'u8[512]{0}', space=vmem, size = 0x400, scoped, tag = 'output window, operand 0, single buffered']
    #allocation4 [shape = 's32[1]{0}', space=sflag, size = 0x4, scoped, tag = 'scoped memory for tpu_custom_call.1']
    %13 = vsyncpa [#allocation4], 0
    // Predicated region
    $region2: #{tpu_custom_call.1} parent=1 // pred_check
      _
    $region3: #{tpu_custom_call.1} parent=1 // pred_check_branch
      %15 = sbr.rel (0) target = $region5
    $region4: #{tpu_custom_call.1} parent=1 // pred_region
      _
    $region5: #{tpu_custom_call.1} parent=1 // pred_fallthru
      _
    // Predicated region
    $region6: #{tpu_custom_call.1} parent=1 // pred_check
      _
    $region7: #{tpu_custom_call.1} parent=1 // pred_check_branch
      %17 = sbr.rel (0) target = $region9
    $region8: #{tpu_custom_call.1} parent=1 // pred_region
      _
    $region9: #{tpu_custom_call.1} parent=1 // pred_fallthru
      _
    // Predicated region
    $region10: #{tpu_custom_call.1} parent=1 // pred_check
      _
    $region11: #{tpu_custom_call.1} parent=1 // pred_check_branch
      %19 = sbr.rel (0) target = $region13
    $region12: #{tpu_custom_call.1} parent=1 // pred_region
      _
    $region13: #{tpu_custom_call.1} parent=1 // pred_fallthru
      _
    // Predicated region
    $region14: #{tpu_custom_call.1} parent=1 // pred_check
      _
    $region15: #{tpu_custom_call.1} parent=1 // pred_check_branch
      %21 = sbr.rel (0) target = $region17
    $region16: #{tpu_custom_call.1} parent=1 // pred_region
      _
    $region17: #{tpu_custom_call.1} parent=1 // pred_fallthru
      _
    // Predicated region
    $region18: #{tpu_custom_call.1} parent=1 // pred_check
      _
    $region19: #{tpu_custom_call.1} parent=1 // pred_check_branch
      %23 = sbr.rel (0) target = $region21
    $region20: #{tpu_custom_call.1} parent=1 // pred_region
      _
    $region21: #{tpu_custom_call.1} parent=1 // pred_fallthru
      _
    // Predicated region
    $region22: #{tpu_custom_call.1} parent=1 // pred_check
      _
    $region23: #{tpu_custom_call.1} parent=1 // pred_check_branch
      %25 = sbr.rel (0) target = $region25
    $region24: #{tpu_custom_call.1} parent=1 // pred_region
      _
    $region25: #{tpu_custom_call.1} parent=1 // pred_fallthru
      _
    // Predicated region
    $region26: #{tpu_custom_call.1} parent=1 // pred_check
      _
    $region27: #{tpu_custom_call.1} parent=1 // pred_check_branch
      %27 = sbr.rel (0) target = $region29
    $region28: #{tpu_custom_call.1} parent=1 // pred_region
      _
    $region29: #{tpu_custom_call.1} parent=1 // pred_fallthru
      _
    %v29 = vld [vmem:[%s0] sm:$0xf]
    %v30 = vld [vmem:[%s0 + $0x4] sm:$0xf]
    %v31 = vld [vmem:[%s0 + $0x8] sm:$0xf]
    %v32 = vld [vmem:[%s0 + $0xc] sm:$0xf]
    %v33 = vld [vmem:[%s0 + $0x10] sm:$0xf]
    %v34 = vld [vmem:[%s0 + $0x14] sm:$0xf]
    %v35 = vld [vmem:[%s0 + $0x18] sm:$0xf]
    %v36 = vld [vmem:[%s0 + $0x1c] sm:$0xf]
    %v37 = vld [vmem:[%s0 + $0x20] sm:$0xf]
    %v38 = vld [vmem:[%s0 + $0x24] sm:$0xf]
    %v39 = vld [vmem:[%s0 + $0x28] sm:$0xf]
    %v40 = vld [vmem:[%s0 + $0x2c] sm:$0xf]
    %v41 = vld [vmem:[%s0 + $0x30] sm:$0xf]
    %v42 = vld [vmem:[%s0 + $0x34] sm:$0xf]
    %v43 = vld [vmem:[%s0 + $0x38] sm:$0xf]
    %v44 = vld [vmem:[%s0 + $0x3c] sm:$0xf]
    %v45 = vld [vmem:[%s1] sm:$0xf]
    %v46 = vld [vmem:[%s1 + $0x4] sm:$0xf]
    %v47 = vld [vmem:[%s1 + $0x8] sm:$0xf]
    %v48 = vld [vmem:[%s1 + $0xc] sm:$0xf]
    %v49 = vld [vmem:[%s1 + $0x10] sm:$0xf]
    %v50 = vld [vmem:[%s1 + $0x14] sm:$0xf]
    %v51 = vld [vmem:[%s1 + $0x18] sm:$0xf]
    %v52 = vld [vmem:[%s1 + $0x1c] sm:$0xf]
    %v53 = vld [vmem:[%s1 + $0x20] sm:$0xf]
    %v54 = vld [vmem:[%s1 + $0x24] sm:$0xf]
    %v55 = vld [vmem:[%s1 + $0x28] sm:$0xf]
    %v56 = vld [vmem:[%s1 + $0x2c] sm:$0xf]
    %v57 = vld [vmem:[%s1 + $0x30] sm:$0xf]
    %v58 = vld [vmem:[%s1 + $0x34] sm:$0xf]
    %v59 = vld [vmem:[%s1 + $0x38] sm:$0xf]
    %v60 = vld [vmem:[%s1 + $0x3c] sm:$0xf]
    %v61 = vld [vmem:[%s1 + $0x40] sm:$0xf]
    %v62 = vld [vmem:[%s1 + $0x44] sm:$0xf]
    %v63 = vld [vmem:[%s1 + $0x48] sm:$0xf]
    %v64 = vld [vmem:[%s1 + $0x4c] sm:$0xf]
    %v65 = vld [vmem:[%s1 + $0x50] sm:$0xf]
    %v66 = vld [vmem:[%s1 + $0x54] sm:$0xf]
    %v67 = vld [vmem:[%s1 + $0x58] sm:$0xf]
    %v68 = vld [vmem:[%s1 + $0x5c] sm:$0xf]
    %v69 = vld [vmem:[%s1 + $0x60] sm:$0xf]
    %v70 = vld [vmem:[%s1 + $0x64] sm:$0xf]
    %v71 = vld [vmem:[%s1 + $0x68] sm:$0xf]
    %v72 = vld [vmem:[%s1 + $0x6c] sm:$0xf]
    %v73 = vld [vmem:[%s1 + $0x70] sm:$0xf]
    %v74 = vld [vmem:[%s1 + $0x74] sm:$0xf]
    %v75 = vld [vmem:[%s1 + $0x78] sm:$0xf]
    %v76 = vld [vmem:[%s1 + $0x7c] sm:$0xf]
    %v77 = vld [vmem:[%s2] sm:$0xff]
    %v78 = vld [vmem:[%s2 + $0x8] sm:$0xff]
    %v79 = vld [vmem:[%s2 + $0x10] sm:$0xff]
    %v80 = vld [vmem:[%s2 + $0x18] sm:$0xff]
    %v81 = vld [vmem:[%s2 + $0x20] sm:$0xff]
    %v82 = vld [vmem:[%s2 + $0x28] sm:$0xff]
    %v83 = vld [vmem:[%s2 + $0x30] sm:$0xff]
    %v84 = vld [vmem:[%s2 + $0x38] sm:$0xff]
    %v85 = vld [vmem:[%s2 + $0x40] sm:$0xff]
    %v86 = vld [vmem:[%s2 + $0x48] sm:$0xff]
    %v87 = vld [vmem:[%s2 + $0x50] sm:$0xff]
    %v88 = vld [vmem:[%s2 + $0x58] sm:$0xff]
    %v89 = vld [vmem:[%s2 + $0x60] sm:$0xff]
    %v90 = vld [vmem:[%s2 + $0x68] sm:$0xff]
    %v91 = vld [vmem:[%s2 + $0x70] sm:$0xff]
    %v92 = vld [vmem:[%s2 + $0x78] sm:$0xff]
    %v93 = vld [vmem:[%s2 + $0x80] sm:$0xff]
    %v94 = vld [vmem:[%s2 + $0x88] sm:$0xff]
    %v95 = vld [vmem:[%s2 + $0x90] sm:$0xff]
    %v96 = vld [vmem:[%s2 + $0x98] sm:$0xff]
    %v97 = vld [vmem:[%s2 + $0xa0] sm:$0xff]
    %v98 = vld [vmem:[%s2 + $0xa8] sm:$0xff]
    %v99 = vld [vmem:[%s2 + $0xb0] sm:$0xff]
    %v100 = vld [vmem:[%s2 + $0xb8] sm:$0xff]
    %v101 = vld [vmem:[%s2 + $0xc0] sm:$0xff]
    %v102 = vld [vmem:[%s2 + $0xc8] sm:$0xff]
    %v103 = vld [vmem:[%s2 + $0xd0] sm:$0xff]
    %v104 = vld [vmem:[%s2 + $0xd8] sm:$0xff]
    %v105 = vld [vmem:[%s2 + $0xe0] sm:$0xff]
    %v106 = vld [vmem:[%s2 + $0xe8] sm:$0xff]
    %v107 = vld [vmem:[%s2 + $0xf0] sm:$0xff]
    %v108 = vld [vmem:[%s2 + $0xf8] sm:$0xff]
    %110 = vset.pattern.permute.xlu0 0
    %111 = vperm.xlu0 %110, %v77
    %v112 = vpop.permute.xlu0 %111
    %115 = vset.pattern.permute.xlu0 0
    %116 = vperm.xlu0 %115, %v78
    %v117 = vpop.permute.xlu0 %116
    %120 = vset.pattern.permute.xlu0 0
    %121 = vperm.xlu0 %120, %v79
    %v122 = vpop.permute.xlu0 %121
    %125 = vset.pattern.permute.xlu0 0
    %126 = vperm.xlu0 %125, %v80
    %v127 = vpop.permute.xlu0 %126
    %130 = vset.pattern.permute.xlu0 0
    %131 = vperm.xlu0 %130, %v81
    %v132 = vpop.permute.xlu0 %131
    %135 = vset.pattern.permute.xlu0 0
    %136 = vperm.xlu0 %135, %v82
    %v137 = vpop.permute.xlu0 %136
    %140 = vset.pattern.permute.xlu0 0
    %141 = vperm.xlu0 %140, %v83
    %v142 = vpop.permute.xlu0 %141
    %145 = vset.pattern.permute.xlu0 0
    %146 = vperm.xlu0 %145, %v84
    %v147 = vpop.permute.xlu0 %146
    %150 = vset.pattern.permute.xlu0 0
    %151 = vperm.xlu0 %150, %v85
    %v152 = vpop.permute.xlu0 %151
    %155 = vset.pattern.permute.xlu0 0
    %156 = vperm.xlu0 %155, %v86
    %v157 = vpop.permute.xlu0 %156
    %160 = vset.pattern.permute.xlu0 0
    %161 = vperm.xlu0 %160, %v87
    %v162 = vpop.permute.xlu0 %161
    %165 = vset.pattern.permute.xlu0 0
    %166 = vperm.xlu0 %165, %v88
    %v167 = vpop.permute.xlu0 %166
    %170 = vset.pattern.permute.xlu0 0
    %171 = vperm.xlu0 %170, %v89
    %v172 = vpop.permute.xlu0 %171
    %175 = vset.pattern.permute.xlu0 0
    %176 = vperm.xlu0 %175, %v90
    %v177 = vpop.permute.xlu0 %176
    %180 = vset.pattern.permute.xlu0 0
    %181 = vperm.xlu0 %180, %v91
    %v182 = vpop.permute.xlu0 %181
    %185 = vset.pattern.permute.xlu0 0
    %186 = vperm.xlu0 %185, %v92
    %v187 = vpop.permute.xlu0 %186
    %190 = vset.pattern.permute.xlu0 0
    %191 = vperm.xlu0 %190, %v93
    %v192 = vpop.permute.xlu0 %191
    %195 = vset.pattern.permute.xlu0 0
    %196 = vperm.xlu0 %195, %v94
    %v197 = vpop.permute.xlu0 %196
    %200 = vset.pattern.permute.xlu0 0
    %201 = vperm.xlu0 %200, %v95
    %v202 = vpop.permute.xlu0 %201
    %205 = vset.pattern.permute.xlu0 0
    %206 = vperm.xlu0 %205, %v96
    %v207 = vpop.permute.xlu0 %206
    %210 = vset.pattern.permute.xlu0 0
    %211 = vperm.xlu0 %210, %v97
    %v212 = vpop.permute.xlu0 %211
    %215 = vset.pattern.permute.xlu0 0
    %216 = vperm.xlu0 %215, %v98
    %v217 = vpop.permute.xlu0 %216
    %220 = vset.pattern.permute.xlu0 0
    %221 = vperm.xlu0 %220, %v99
    %v222 = vpop.permute.xlu0 %221
    %225 = vset.pattern.permute.xlu0 0
    %226 = vperm.xlu0 %225, %v100
    %v227 = vpop.permute.xlu0 %226
    %230 = vset.pattern.permute.xlu0 0
    %231 = vperm.xlu0 %230, %v101
    %v232 = vpop.permute.xlu0 %231
    %235 = vset.pattern.permute.xlu0 0
    %236 = vperm.xlu0 %235, %v102
    %v237 = vpop.permute.xlu0 %236
    %240 = vset.pattern.permute.xlu0 0
    %241 = vperm.xlu0 %240, %v103
    %v242 = vpop.permute.xlu0 %241
    %245 = vset.pattern.permute.xlu0 0
    %246 = vperm.xlu0 %245, %v104
    %v247 = vpop.permute.xlu0 %246
    %250 = vset.pattern.permute.xlu0 0
    %251 = vperm.xlu0 %250, %v105
    %v252 = vpop.permute.xlu0 %251
    %255 = vset.pattern.permute.xlu0 0
    %256 = vperm.xlu0 %255, %v106
    %v257 = vpop.permute.xlu0 %256
    %260 = vset.pattern.permute.xlu0 0
    %261 = vperm.xlu0 %260, %v107
    %v262 = vpop.permute.xlu0 %261
    %265 = vset.pattern.permute.xlu0 0
    %266 = vperm.xlu0 %265, %v108
    %v267 = vpop.permute.xlu0 %266
    %v301 = vunpack.c.l.b16 %v45
    %v302 = vunpack.c.l.b16 %v46
    %v303 = vunpack.c.l.b16 %v47
    %v304 = vunpack.c.l.b16 %v48
    %v305 = vunpack.c.l.b16 %v49
    %v306 = vunpack.c.l.b16 %v50
    %v307 = vunpack.c.l.b16 %v51
    %v308 = vunpack.c.l.b16 %v52
    %v309 = vunpack.c.l.b16 %v53
    %v310 = vunpack.c.l.b16 %v54
    %v311 = vunpack.c.l.b16 %v55
    %v312 = vunpack.c.l.b16 %v56
    %v313 = vunpack.c.l.b16 %v57
    %v314 = vunpack.c.l.b16 %v58
    %v315 = vunpack.c.l.b16 %v59
    %v316 = vunpack.c.l.b16 %v60
    %v317 = vunpack.c.l.b16 %v61
    %v318 = vunpack.c.l.b16 %v62
    %v319 = vunpack.c.l.b16 %v63
    %v320 = vunpack.c.l.b16 %v64
    %v321 = vunpack.c.l.b16 %v65
    %v322 = vunpack.c.l.b16 %v66
    %v323 = vunpack.c.l.b16 %v67
    %v324 = vunpack.c.l.b16 %v68
    %v325 = vunpack.c.l.b16 %v69
    %v326 = vunpack.c.l.b16 %v70
    %v327 = vunpack.c.l.b16 %v71
    %v328 = vunpack.c.l.b16 %v72
    %v329 = vunpack.c.l.b16 %v73
    %v330 = vunpack.c.l.b16 %v74
    %v331 = vunpack.c.l.b16 %v75
    %v332 = vunpack.c.l.b16 %v76
    %v333 = vpack.c.b16 %v302, %v301
    %v334 = vpack.c.b16 %v304, %v303
    %v335 = vpack.c.b16 %v306, %v305
    %v336 = vpack.c.b16 %v308, %v307
    %v337 = vpack.c.b16 %v310, %v309
    %v338 = vpack.c.b16 %v312, %v311
    %v339 = vpack.c.b16 %v314, %v313
    %v340 = vpack.c.b16 %v316, %v315
    %v341 = vpack.c.b16 %v318, %v317
    %v342 = vpack.c.b16 %v320, %v319
    %v343 = vpack.c.b16 %v322, %v321
    %v344 = vpack.c.b16 %v324, %v323
    %v345 = vpack.c.b16 %v326, %v325
    %v346 = vpack.c.b16 %v328, %v327
    %v347 = vpack.c.b16 %v330, %v329
    %v348 = vpack.c.b16 %v332, %v331
    %v365 = vunpack.c.l.b16 %v29
    %v366 = vunpack.c.l.b16 %v30
    %v367 = vunpack.c.l.b16 %v31
    %v368 = vunpack.c.l.b16 %v32
    %v369 = vunpack.c.l.b16 %v33
    %v370 = vunpack.c.l.b16 %v34
    %v371 = vunpack.c.l.b16 %v35
    %v372 = vunpack.c.l.b16 %v36
    %v373 = vunpack.c.l.b16 %v37
    %v374 = vunpack.c.l.b16 %v38
    %v375 = vunpack.c.l.b16 %v39
    %v376 = vunpack.c.l.b16 %v40
    %v377 = vunpack.c.l.b16 %v41
    %v378 = vunpack.c.l.b16 %v42
    %v379 = vunpack.c.l.b16 %v43
    %v380 = vunpack.c.l.b16 %v44
    %v381 = vpack.c.b16 %v366, %v365
    %v382 = vpack.c.b16 %v368, %v367
    %v383 = vpack.c.b16 %v370, %v369
    %v384 = vpack.c.b16 %v372, %v371
    %v385 = vpack.c.b16 %v374, %v373
    %v386 = vpack.c.b16 %v376, %v375
    %v387 = vpack.c.b16 %v378, %v377
    %v388 = vpack.c.b16 %v380, %v379
    %vm389 = vcmask 392192
    %v391 = vsel %vm389, %v333, 0
    %v394 = vsel %vm389, %v334, 0
    %v397 = vsel %vm389, %v335, 0
    %v400 = vsel %vm389, %v336, 0
    %v403 = vsel %vm389, %v337, 0
    %v406 = vsel %vm389, %v338, 0
    %v409 = vsel %vm389, %v339, 0
    %v412 = vsel %vm389, %v340, 0
    %v415 = vsel %vm389, %v341, 0
    %v418 = vsel %vm389, %v342, 0
    %v421 = vsel %vm389, %v343, 0
    %v424 = vsel %vm389, %v344, 0
    %v427 = vsel %vm389, %v345, 0
    %v430 = vsel %vm389, %v346, 0
    %v433 = vsel %vm389, %v347, 0
    %v436 = vsel %vm389, %v348, 0
    %v439 = vsel %vm389, %v381, 0
    %v442 = vsel %vm389, %v382, 0
    %v445 = vsel %vm389, %v383, 0
    %v448 = vsel %vm389, %v384, 0
    %v451 = vsel %vm389, %v385, 0
    %v454 = vsel %vm389, %v386, 0
    %v457 = vsel %vm389, %v387, 0
    %v460 = vsel %vm389, %v388, 0
    %462 = vmatprep.subr.bf16.mxu0 0
    %463 = vmatpush1.bf16.xpose.msra.mxu0 %v439
    %464 = vmatprep.subr.bf16.mxu0 0
    %465 = vmatpush1.bf16.xpose.msra.mxu0 %v442
    %466 = vmatprep.subr.bf16.mxu0 0
    %467 = vmatpush1.bf16.xpose.msra.mxu0 %v445
    %468 = vmatprep.subr.bf16.mxu0 0
    %469 = vmatpush1.bf16.xpose.msra.mxu0 %v448
    %470 = vmatprep.subr.bf16.mxu0 0
    %471 = vmatpush1.bf16.xpose.msra.mxu0 %v451
    %472 = vmatprep.subr.bf16.mxu0 0
    %473 = vmatpush1.bf16.xpose.msra.mxu0 %v454
    %474 = vmatprep.subr.bf16.mxu0 0
    %475 = vmatpush1.bf16.xpose.msra.mxu0 %v457
    %476 = vmatprep.subr.bf16.mxu0 0
    %477 = vmatpush1.bf16.xpose.msra.mxu0 %v460
    %478 = vmatprep.subr.bf16.mxu0 0
    %479 = vmatpush1.bf16.xpose.msra.mxu0 0
    %480 = vmatprep.subr.bf16.mxu0 0
    %481 = vmatpush1.bf16.xpose.msra.mxu0 0
    %482 = vmatprep.subr.bf16.mxu0 0
    %483 = vmatpush1.bf16.xpose.msra.mxu0 0
    %484 = vmatprep.subr.bf16.mxu0 0
    %485 = vmatpush1.bf16.xpose.msra.mxu0 0
    %486 = vmatprep.subr.bf16.mxu0 0
    %487 = vmatpush1.bf16.xpose.msra.mxu0 0
    %488 = vmatprep.subr.bf16.mxu0 0
    %489 = vmatpush1.bf16.xpose.msra.mxu0 0
    %490 = vmatprep.subr.bf16.mxu0 0
    %491 = vmatpush1.bf16.xpose.msra.mxu0 0
    %492 = vmatprep.subr.bf16.mxu0 0
    %493 = vmatpush1.bf16.xpose.msra.mxu0 0
    %494 = vmatprep.mubr.bf16.mxu0 0
    %495 = vmatmul.mubr.bf16.gmra.mrb[0].mxu0 %v391
    %v496 = vpop.f32.mrb[0].mxu0
    %v497 = vadd.f32 %v112, %v496
    %v498 = vpop.f32.mrb[0].mxu0
    %v499 = vpop.f32.mrb[0].mxu0
    %v500 = vadd.f32 %v117, %v499
    %v501 = vpop.f32.mrb[0].mxu0
    %502 = vmatprep.mubr.bf16.mxu0 0
    %503 = vmatmul.mubr.bf16.gmra.mrb[0].mxu0 %v394
    %v504 = vpop.f32.mrb[0].mxu0
    %v505 = vadd.f32 %v122, %v504
    %v506 = vpop.f32.mrb[0].mxu0
    %v507 = vpop.f32.mrb[0].mxu0
    %v508 = vadd.f32 %v127, %v507
    %v509 = vpop.f32.mrb[0].mxu0
    %510 = vmatprep.mubr.bf16.mxu0 0
    %511 = vmatmul.mubr.bf16.gmra.mrb[0].mxu0 %v397
    %v512 = vpop.f32.mrb[0].mxu0
    %v513 = vadd.f32 %v132, %v512
    %v514 = vpop.f32.mrb[0].mxu0
    %v515 = vpop.f32.mrb[0].mxu0
    %v516 = vadd.f32 %v137, %v515
    %v517 = vpop.f32.mrb[0].mxu0
    %518 = vmatprep.mubr.bf16.mxu0 0
    %519 = vmatmul.mubr.bf16.gmra.mrb[0].mxu0 %v400
    %v520 = vpop.f32.mrb[0].mxu0
    %v521 = vadd.f32 %v142, %v520
    %v522 = vpop.f32.mrb[0].mxu0
    %v523 = vpop.f32.mrb[0].mxu0
    %v524 = vadd.f32 %v147, %v523
    %v525 = vpop.f32.mrb[0].mxu0
    %526 = vmatprep.mubr.bf16.mxu0 0
    %527 = vmatmul.mubr.bf16.gmra.mrb[0].mxu0 %v403
    %v528 = vpop.f32.mrb[0].mxu0
    %v529 = vadd.f32 %v152, %v528
    %v530 = vpop.f32.mrb[0].mxu0
    %v531 = vpop.f32.mrb[0].mxu0
    %v532 = vadd.f32 %v157, %v531
    %v533 = vpop.f32.mrb[0].mxu0
    %534 = vmatprep.mubr.bf16.mxu0 0
    %535 = vmatmul.mubr.bf16.gmra.mrb[0].mxu0 %v406
    %v536 = vpop.f32.mrb[0].mxu0
    %v537 = vadd.f32 %v162, %v536
    %v538 = vpop.f32.mrb[0].mxu0
    %v539 = vpop.f32.mrb[0].mxu0
    %v540 = vadd.f32 %v167, %v539
    %v541 = vpop.f32.mrb[0].mxu0
    %542 = vmatprep.mubr.bf16.mxu0 0
    %543 = vmatmul.mubr.bf16.gmra.mrb[0].mxu0 %v409
    %v544 = vpop.f32.mrb[0].mxu0
    %v545 = vadd.f32 %v172, %v544
    %v546 = vpop.f32.mrb[0].mxu0
    %v547 = vpop.f32.mrb[0].mxu0
    %v548 = vadd.f32 %v177, %v547
    %v549 = vpop.f32.mrb[0].mxu0
    %550 = vmatprep.mubr.bf16.mxu0 0
    %551 = vmatmul.mubr.bf16.gmra.mrb[0].mxu0 %v412
    %v552 = vpop.f32.mrb[0].mxu0
    %v553 = vadd.f32 %v182, %v552
    %v554 = vpop.f32.mrb[0].mxu0
    %v555 = vpop.f32.mrb[0].mxu0
    %v556 = vadd.f32 %v187, %v555
    %v557 = vpop.f32.mrb[0].mxu0
    %558 = vmatprep.mubr.bf16.mxu0 0
    %559 = vmatmul.mubr.bf16.gmra.mrb[0].mxu0 %v415
    %v560 = vpop.f32.mrb[0].mxu0
    %v561 = vadd.f32 %v192, %v560
    %v562 = vpop.f32.mrb[0].mxu0
    %v563 = vpop.f32.mrb[0].mxu0
    %v564 = vadd.f32 %v197, %v563
    %v565 = vpop.f32.mrb[0].mxu0
    %566 = vmatprep.mubr.bf16.mxu0 0
    %567 = vmatmul.mubr.bf16.gmra.mrb[0].mxu0 %v418
    %v568 = vpop.f32.mrb[0].mxu0
    %v569 = vadd.f32 %v202, %v568
    %v570 = vpop.f32.mrb[0].mxu0
    %v571 = vpop.f32.mrb[0].mxu0
    %v572 = vadd.f32 %v207, %v571
    %v573 = vpop.f32.mrb[0].mxu0
    %574 = vmatprep.mubr.bf16.mxu0 0
    %575 = vmatmul.mubr.bf16.gmra.mrb[0].mxu0 %v421
    %v576 = vpop.f32.mrb[0].mxu0
    %v577 = vadd.f32 %v212, %v576
    %v578 = vpop.f32.mrb[0].mxu0
    %v579 = vpop.f32.mrb[0].mxu0
    %v580 = vadd.f32 %v217, %v579
    %v581 = vpop.f32.mrb[0].mxu0
    %582 = vmatprep.mubr.bf16.mxu0 0
    %583 = vmatmul.mubr.bf16.gmra.mrb[0].mxu0 %v424
    %v584 = vpop.f32.mrb[0].mxu0
    %v585 = vadd.f32 %v222, %v584
    %v586 = vpop.f32.mrb[0].mxu0
    %v587 = vpop.f32.mrb[0].mxu0
    %v588 = vadd.f32 %v227, %v587
    %v589 = vpop.f32.mrb[0].mxu0
    %590 = vmatprep.mubr.bf16.mxu0 0
    %591 = vmatmul.mubr.bf16.gmra.mrb[0].mxu0 %v427
    %v592 = vpop.f32.mrb[0].mxu0
    %v593 = vadd.f32 %v232, %v592
    %v594 = vpop.f32.mrb[0].mxu0
    %v595 = vpop.f32.mrb[0].mxu0
    %v596 = vadd.f32 %v237, %v595
    %v597 = vpop.f32.mrb[0].mxu0
    %598 = vmatprep.mubr.bf16.mxu0 0
    %599 = vmatmul.mubr.bf16.gmra.mrb[0].mxu0 %v430
    %v600 = vpop.f32.mrb[0].mxu0
    %v601 = vadd.f32 %v242, %v600
    %v602 = vpop.f32.mrb[0].mxu0
    %v603 = vpop.f32.mrb[0].mxu0
    %v604 = vadd.f32 %v247, %v603
    %v605 = vpop.f32.mrb[0].mxu0
    %606 = vmatprep.mubr.bf16.mxu0 0
    %607 = vmatmul.mubr.bf16.gmra.mrb[0].mxu0 %v433
    %v608 = vpop.f32.mrb[0].mxu0
    %v609 = vadd.f32 %v252, %v608
    %v610 = vpop.f32.mrb[0].mxu0
    %v611 = vpop.f32.mrb[0].mxu0
    %v612 = vadd.f32 %v257, %v611
    %v613 = vpop.f32.mrb[0].mxu0
    %614 = vmatprep.mubr.bf16.mxu0 0
    %615 = vmatmul.mubr.bf16.gmra.mrb[0].mxu0 %v436
    %v616 = vpop.f32.mrb[0].mxu0
    %v617 = vadd.f32 %v262, %v616
    %v618 = vpop.f32.mrb[0].mxu0
    %v619 = vpop.f32.mrb[0].mxu0
    %v620 = vadd.f32 %v267, %v619
    %v621 = vpop.f32.mrb[0].mxu0
    %622 = vdwg.mxu0
    %v623 = vmax.f32 %v497, 0.0
    %v624 = vmax.f32 %v500, 0.0
    %v625 = vmax.f32 %v505, 0.0
    %v626 = vmax.f32 %v508, 0.0
    %v627 = vmax.f32 %v513, 0.0
    %v628 = vmax.f32 %v516, 0.0
    %v629 = vmax.f32 %v521, 0.0
    %v630 = vmax.f32 %v524, 0.0
    %v631 = vmax.f32 %v529, 0.0
    %v632 = vmax.f32 %v532, 0.0
    %v633 = vmax.f32 %v537, 0.0
    %v634 = vmax.f32 %v540, 0.0
    %v635 = vmax.f32 %v545, 0.0
    %v636 = vmax.f32 %v548, 0.0
    %v637 = vmax.f32 %v553, 0.0
    %v638 = vmax.f32 %v556, 0.0
    %v639 = vmax.f32 %v561, 0.0
    %v640 = vmax.f32 %v564, 0.0
    %v641 = vmax.f32 %v569, 0.0
    %v642 = vmax.f32 %v572, 0.0
    %v643 = vmax.f32 %v577, 0.0
    %v644 = vmax.f32 %v580, 0.0
    %v645 = vmax.f32 %v585, 0.0
    %v646 = vmax.f32 %v588, 0.0
    %v647 = vmax.f32 %v593, 0.0
    %v648 = vmax.f32 %v596, 0.0
    %v649 = vmax.f32 %v601, 0.0
    %v650 = vmax.f32 %v604, 0.0
    %v651 = vmax.f32 %v609, 0.0
    %v652 = vmax.f32 %v612, 0.0
    %v653 = vmax.f32 %v617, 0.0
    %v654 = vmax.f32 %v620, 0.0
    %v655 = vld [vmem:[%s3] sm:$0xff]
    %v656 = vld [vmem:[%s3 + $0x8] sm:$0xff]
    %v657 = vld [vmem:[%s3 + $0x10] sm:$0xff]
    %v658 = vld [vmem:[%s3 + $0x18] sm:$0xff]
    %v659 = vld [vmem:[%s3 + $0x20] sm:$0xff]
    %v660 = vld [vmem:[%s3 + $0x28] sm:$0xff]
    %v661 = vld [vmem:[%s3 + $0x30] sm:$0xff]
    %v662 = vld [vmem:[%s3 + $0x38] sm:$0xff]
    %v663 = vld [vmem:[%s3 + $0x40] sm:$0xff]
    %v664 = vld [vmem:[%s3 + $0x48] sm:$0xff]
    %v665 = vld [vmem:[%s3 + $0x50] sm:$0xff]
    %v666 = vld [vmem:[%s3 + $0x58] sm:$0xff]
    %v667 = vld [vmem:[%s3 + $0x60] sm:$0xff]
    %v668 = vld [vmem:[%s3 + $0x68] sm:$0xff]
    %v669 = vld [vmem:[%s3 + $0x70] sm:$0xff]
    %v670 = vld [vmem:[%s3 + $0x78] sm:$0xff]
    %v671 = vld [vmem:[%s3 + $0x80] sm:$0xff]
    %v672 = vld [vmem:[%s3 + $0x88] sm:$0xff]
    %v673 = vld [vmem:[%s3 + $0x90] sm:$0xff]
    %v674 = vld [vmem:[%s3 + $0x98] sm:$0xff]
    %v675 = vld [vmem:[%s3 + $0xa0] sm:$0xff]
    %v676 = vld [vmem:[%s3 + $0xa8] sm:$0xff]
    %v677 = vld [vmem:[%s3 + $0xb0] sm:$0xff]
    %v678 = vld [vmem:[%s3 + $0xb8] sm:$0xff]
    %v679 = vld [vmem:[%s3 + $0xc0] sm:$0xff]
    %v680 = vld [vmem:[%s3 + $0xc8] sm:$0xff]
    %v681 = vld [vmem:[%s3 + $0xd0] sm:$0xff]
    %v682 = vld [vmem:[%s3 + $0xd8] sm:$0xff]
    %v683 = vld [vmem:[%s3 + $0xe0] sm:$0xff]
    %v684 = vld [vmem:[%s3 + $0xe8] sm:$0xff]
    %v685 = vld [vmem:[%s3 + $0xf0] sm:$0xff]
    %v686 = vld [vmem:[%s3 + $0xf8] sm:$0xff]
    %v687 = vpack.c.bf16 %v624, %v623
    %v688 = vpack.c.bf16 %v626, %v625
    %v689 = vpack.c.bf16 %v628, %v627
    %v690 = vpack.c.bf16 %v630, %v629
    %v691 = vpack.c.bf16 %v632, %v631
    %v692 = vpack.c.bf16 %v634, %v633
    %v693 = vpack.c.bf16 %v636, %v635
    %v694 = vpack.c.bf16 %v638, %v637
    %v695 = vpack.c.bf16 %v640, %v639
    %v696 = vpack.c.bf16 %v642, %v641
    %v697 = vpack.c.bf16 %v644, %v643
    %v698 = vpack.c.bf16 %v646, %v645
    %v699 = vpack.c.bf16 %v648, %v647
    %v700 = vpack.c.bf16 %v650, %v649
    %v701 = vpack.c.bf16 %v652, %v651
    %v702 = vpack.c.bf16 %v654, %v653
    %v703 = vld [vmem:[%s4] sm:$0xff]
    %v704 = vld [vmem:[%s4 + $0x8] sm:$0xff]
    %v705 = vld [vmem:[%s4 + $0x10] sm:$0xff]
    %v706 = vld [vmem:[%s4 + $0x18] sm:$0xff]
    %v707 = vld [vmem:[%s4 + $0x20] sm:$0xff]
    %v708 = vld [vmem:[%s4 + $0x28] sm:$0xff]
    %v709 = vld [vmem:[%s4 + $0x30] sm:$0xff]
    %v710 = vld [vmem:[%s4 + $0x38] sm:$0xff]
    %v711 = vld [vmem:[%s4 + $0x40] sm:$0xff]
    %v712 = vld [vmem:[%s4 + $0x48] sm:$0xff]
    %v713 = vld [vmem:[%s4 + $0x50] sm:$0xff]
    %v714 = vld [vmem:[%s4 + $0x58] sm:$0xff]
    %v715 = vld [vmem:[%s4 + $0x60] sm:$0xff]
    %v716 = vld [vmem:[%s4 + $0x68] sm:$0xff]
    %v717 = vld [vmem:[%s4 + $0x70] sm:$0xff]
    %v718 = vld [vmem:[%s4 + $0x78] sm:$0xff]
    %v719 = vld [vmem:[%s4 + $0x80] sm:$0xff]
    %v720 = vld [vmem:[%s4 + $0x88] sm:$0xff]
    %v721 = vld [vmem:[%s4 + $0x90] sm:$0xff]
    %v722 = vld [vmem:[%s4 + $0x98] sm:$0xff]
    %v723 = vld [vmem:[%s4 + $0xa0] sm:$0xff]
    %v724 = vld [vmem:[%s4 + $0xa8] sm:$0xff]
    %v725 = vld [vmem:[%s4 + $0xb0] sm:$0xff]
    %v726 = vld [vmem:[%s4 + $0xb8] sm:$0xff]
    %v727 = vld [vmem:[%s4 + $0xc0] sm:$0xff]
    %v728 = vld [vmem:[%s4 + $0xc8] sm:$0xff]
    %v729 = vld [vmem:[%s4 + $0xd0] sm:$0xff]
    %v730 = vld [vmem:[%s4 + $0xd8] sm:$0xff]
    %v731 = vld [vmem:[%s4 + $0xe0] sm:$0xff]
    %v732 = vld [vmem:[%s4 + $0xe8] sm:$0xff]
    %v733 = vld [vmem:[%s4 + $0xf0] sm:$0xff]
    %v734 = vld [vmem:[%s4 + $0xf8] sm:$0xff]
    %736 = vset.pattern.permute.xlu0 0
    %737 = vperm.xlu0 %736, %v703
    %v738 = vpop.permute.xlu0 %737
    %741 = vset.pattern.permute.xlu0 0
    %742 = vperm.xlu0 %741, %v704
    %v743 = vpop.permute.xlu0 %742
    %746 = vset.pattern.permute.xlu0 0
    %747 = vperm.xlu0 %746, %v705
    %v748 = vpop.permute.xlu0 %747
    %751 = vset.pattern.permute.xlu0 0
    %752 = vperm.xlu0 %751, %v706
    %v753 = vpop.permute.xlu0 %752
    %756 = vset.pattern.permute.xlu0 0
    %757 = vperm.xlu0 %756, %v707
    %v758 = vpop.permute.xlu0 %757
    %761 = vset.pattern.permute.xlu0 0
    %762 = vperm.xlu0 %761, %v708
    %v763 = vpop.permute.xlu0 %762
    %766 = vset.pattern.permute.xlu0 0
    %767 = vperm.xlu0 %766, %v709
    %v768 = vpop.permute.xlu0 %767
    %771 = vset.pattern.permute.xlu0 0
    %772 = vperm.xlu0 %771, %v710
    %v773 = vpop.permute.xlu0 %772
    %776 = vset.pattern.permute.xlu0 0
    %777 = vperm.xlu0 %776, %v711
    %v778 = vpop.permute.xlu0 %777
    %781 = vset.pattern.permute.xlu0 0
    %782 = vperm.xlu0 %781, %v712
    %v783 = vpop.permute.xlu0 %782
    %786 = vset.pattern.permute.xlu0 0
    %787 = vperm.xlu0 %786, %v713
    %v788 = vpop.permute.xlu0 %787
    %791 = vset.pattern.permute.xlu0 0
    %792 = vperm.xlu0 %791, %v714
    %v793 = vpop.permute.xlu0 %792
    %796 = vset.pattern.permute.xlu0 0
    %797 = vperm.xlu0 %796, %v715
    %v798 = vpop.permute.xlu0 %797
    %801 = vset.pattern.permute.xlu0 0
    %802 = vperm.xlu0 %801, %v716
    %v803 = vpop.permute.xlu0 %802
    %806 = vset.pattern.permute.xlu0 0
    %807 = vperm.xlu0 %806, %v717
    %v808 = vpop.permute.xlu0 %807
    %811 = vset.pattern.permute.xlu0 0
    %812 = vperm.xlu0 %811, %v718
    %v813 = vpop.permute.xlu0 %812
    %816 = vset.pattern.permute.xlu0 0
    %817 = vperm.xlu0 %816, %v719
    %v818 = vpop.permute.xlu0 %817
    %821 = vset.pattern.permute.xlu0 0
    %822 = vperm.xlu0 %821, %v720
    %v823 = vpop.permute.xlu0 %822
    %826 = vset.pattern.permute.xlu0 0
    %827 = vperm.xlu0 %826, %v721
    %v828 = vpop.permute.xlu0 %827
    %831 = vset.pattern.permute.xlu0 0
    %832 = vperm.xlu0 %831, %v722
    %v833 = vpop.permute.xlu0 %832
    %836 = vset.pattern.permute.xlu0 0
    %837 = vperm.xlu0 %836, %v723
    %v838 = vpop.permute.xlu0 %837
    %841 = vset.pattern.permute.xlu0 0
    %842 = vperm.xlu0 %841, %v724
    %v843 = vpop.permute.xlu0 %842
    %846 = vset.pattern.permute.xlu0 0
    %847 = vperm.xlu0 %846, %v725
    %v848 = vpop.permute.xlu0 %847
    %851 = vset.pattern.permute.xlu0 0
    %852 = vperm.xlu0 %851, %v726
    %v853 = vpop.permute.xlu0 %852
    %856 = vset.pattern.permute.xlu0 0
    %857 = vperm.xlu0 %856, %v727
    %v858 = vpop.permute.xlu0 %857
    %861 = vset.pattern.permute.xlu0 0
    %862 = vperm.xlu0 %861, %v728
    %v863 = vpop.permute.xlu0 %862
    %866 = vset.pattern.permute.xlu0 0
    %867 = vperm.xlu0 %866, %v729
    %v868 = vpop.permute.xlu0 %867
    %871 = vset.pattern.permute.xlu0 0
    %872 = vperm.xlu0 %871, %v730
    %v873 = vpop.permute.xlu0 %872
    %876 = vset.pattern.permute.xlu0 0
    %877 = vperm.xlu0 %876, %v731
    %v878 = vpop.permute.xlu0 %877
    %881 = vset.pattern.permute.xlu0 0
    %882 = vperm.xlu0 %881, %v732
    %v883 = vpop.permute.xlu0 %882
    %886 = vset.pattern.permute.xlu0 0
    %887 = vperm.xlu0 %886, %v733
    %v888 = vpop.permute.xlu0 %887
    %891 = vset.pattern.permute.xlu0 0
    %892 = vperm.xlu0 %891, %v734
    %v893 = vpop.permute.xlu0 %892
    %v927 = vunpack.c.l.b16 %v655
    %v928 = vunpack.c.h.b16 %v655
    %v929 = vunpack.c.l.b16 %v656
    %v930 = vunpack.c.h.b16 %v656
    %v931 = vunpack.c.l.b16 %v657
    %v932 = vunpack.c.h.b16 %v657
    %v933 = vunpack.c.l.b16 %v658
    %v934 = vunpack.c.h.b16 %v658
    %v935 = vunpack.c.l.b16 %v659
    %v936 = vunpack.c.h.b16 %v659
    %v937 = vunpack.c.l.b16 %v660
    %v938 = vunpack.c.h.b16 %v660
    %v939 = vunpack.c.l.b16 %v661
    %v940 = vunpack.c.h.b16 %v661
    %v941 = vunpack.c.l.b16 %v662
    %v942 = vunpack.c.h.b16 %v662
    %v943 = vunpack.c.l.b16 %v663
    %v944 = vunpack.c.h.b16 %v663
    %v945 = vunpack.c.l.b16 %v664
    %v946 = vunpack.c.h.b16 %v664
    %v947 = vunpack.c.l.b16 %v665
    %v948 = vunpack.c.h.b16 %v665
    %v949 = vunpack.c.l.b16 %v666
    %v950 = vunpack.c.h.b16 %v666
    %v951 = vunpack.c.l.b16 %v667
    %v952 = vunpack.c.h.b16 %v667
    %v953 = vunpack.c.l.b16 %v668
    %v954 = vunpack.c.h.b16 %v668
    %v955 = vunpack.c.l.b16 %v669
    %v956 = vunpack.c.h.b16 %v669
    %v957 = vunpack.c.l.b16 %v670
    %v958 = vunpack.c.h.b16 %v670
    %v959 = vunpack.c.l.b16 %v671
    %v960 = vunpack.c.h.b16 %v671
    %v961 = vunpack.c.l.b16 %v672
    %v962 = vunpack.c.h.b16 %v672
    %v963 = vunpack.c.l.b16 %v673
    %v964 = vunpack.c.h.b16 %v673
    %v965 = vunpack.c.l.b16 %v674
    %v966 = vunpack.c.h.b16 %v674
    %v967 = vunpack.c.l.b16 %v675
    %v968 = vunpack.c.h.b16 %v675
    %v969 = vunpack.c.l.b16 %v676
    %v970 = vunpack.c.h.b16 %v676
    %v971 = vunpack.c.l.b16 %v677
    %v972 = vunpack.c.h.b16 %v677
    %v973 = vunpack.c.l.b16 %v678
    %v974 = vunpack.c.h.b16 %v678
    %v975 = vunpack.c.l.b16 %v679
    %v976 = vunpack.c.h.b16 %v679
    %v977 = vunpack.c.l.b16 %v680
    %v978 = vunpack.c.h.b16 %v680
    %v979 = vunpack.c.l.b16 %v681
    %v980 = vunpack.c.h.b16 %v681
    %v981 = vunpack.c.l.b16 %v682
    %v982 = vunpack.c.h.b16 %v682
    %v983 = vunpack.c.l.b16 %v683
    %v984 = vunpack.c.h.b16 %v683
    %v985 = vunpack.c.l.b16 %v684
    %v986 = vunpack.c.h.b16 %v684
    %v987 = vunpack.c.l.b16 %v685
    %v988 = vunpack.c.h.b16 %v685
    %v989 = vunpack.c.l.b16 %v686
    %v990 = vunpack.c.h.b16 %v686
    %v991 = vpack.c.b16 %v929, %v927
    %v992 = vpack.c.b16 %v930, %v928
    %v993 = vpack.c.b16 %v933, %v931
    %v994 = vpack.c.b16 %v934, %v932
    %v995 = vpack.c.b16 %v937, %v935
    %v996 = vpack.c.b16 %v938, %v936
    %v997 = vpack.c.b16 %v941, %v939
    %v998 = vpack.c.b16 %v942, %v940
    %v999 = vpack.c.b16 %v945, %v943
    %v1000 = vpack.c.b16 %v946, %v944
    %v1001 = vpack.c.b16 %v949, %v947
    %v1002 = vpack.c.b16 %v950, %v948
    %v1003 = vpack.c.b16 %v953, %v951
    %v1004 = vpack.c.b16 %v954, %v952
    %v1005 = vpack.c.b16 %v957, %v955
    %v1006 = vpack.c.b16 %v958, %v956
    %v1007 = vpack.c.b16 %v961, %v959
    %v1008 = vpack.c.b16 %v962, %v960
    %v1009 = vpack.c.b16 %v965, %v963
    %v1010 = vpack.c.b16 %v966, %v964
    %v1011 = vpack.c.b16 %v969, %v967
    %v1012 = vpack.c.b16 %v970, %v968
    %v1013 = vpack.c.b16 %v973, %v971
    %v1014 = vpack.c.b16 %v974, %v972
    %v1015 = vpack.c.b16 %v977, %v975
    %v1016 = vpack.c.b16 %v978, %v976
    %v1017 = vpack.c.b16 %v981, %v979
    %v1018 = vpack.c.b16 %v982, %v980
    %v1019 = vpack.c.b16 %v985, %v983
    %v1020 = vpack.c.b16 %v986, %v984
    %v1021 = vpack.c.b16 %v989, %v987
    %v1022 = vpack.c.b16 %v990, %v988
    %1055 = vmatprep.subr.bf16.mxu0 0
    %1056 = vmatpush1.bf16.msra.mxu0 %v687
    %1057 = vmatprep.subr.bf16.mxu0 0
    %1058 = vmatpush1.bf16.msra.mxu0 %v688
    %1059 = vmatprep.subr.bf16.mxu0 0
    %1060 = vmatpush1.bf16.msra.mxu0 %v689
    %1061 = vmatprep.subr.bf16.mxu0 0
    %1062 = vmatpush1.bf16.msra.mxu0 %v690
    %1063 = vmatprep.subr.bf16.mxu0 0
    %1064 = vmatpush1.bf16.msra.mxu0 %v691
    %1065 = vmatprep.subr.bf16.mxu0 0
    %1066 = vmatpush1.bf16.msra.mxu0 %v692
    %1067 = vmatprep.subr.bf16.mxu0 0
    %1068 = vmatpush1.bf16.msra.mxu0 %v693
    %1069 = vmatprep.subr.bf16.mxu0 0
    %1070 = vmatpush1.bf16.msra.mxu0 %v694
    %1071 = vmatprep.subr.bf16.mxu0 0
    %1072 = vmatpush1.bf16.msra.mxu0 %v695
    %1073 = vmatprep.subr.bf16.mxu0 0
    %1074 = vmatpush1.bf16.msra.mxu0 %v696
    %1075 = vmatprep.subr.bf16.mxu0 0
    %1076 = vmatpush1.bf16.msra.mxu0 %v697
    %1077 = vmatprep.subr.bf16.mxu0 0
    %1078 = vmatpush1.bf16.msra.mxu0 %v698
    %1079 = vmatprep.subr.bf16.mxu0 0
    %1080 = vmatpush1.bf16.msra.mxu0 %v699
    %1081 = vmatprep.subr.bf16.mxu0 0
    %1082 = vmatpush1.bf16.msra.mxu0 %v700
    %1083 = vmatprep.subr.bf16.mxu0 0
    %1084 = vmatpush1.bf16.msra.mxu0 %v701
    %1085 = vmatprep.subr.bf16.mxu0 0
    %1086 = vmatpush1.bf16.msra.mxu0 %v702
    %1087 = vmatprep.mubr.bf16.mxu0 %v992
    %1088 = vmatmul.mubr.bf16.gmra.mrb[0].mxu0 %v991
    %v1089 = vpop.f32.mrb[0].mxu0
    %v1090 = vadd.f32 %v738, %v1089
    %v1091 = vpop.f32.mrb[0].mxu0
    %v1092 = vpop.f32.mrb[0].mxu0
    %v1093 = vadd.f32 %v743, %v1092
    %v1094 = vpop.f32.mrb[0].mxu0
    %1095 = vmatprep.mubr.bf16.mxu0 %v994
    %1096 = vmatmul.mubr.bf16.gmra.mrb[0].mxu0 %v993
    %v1097 = vpop.f32.mrb[0].mxu0
    %v1098 = vadd.f32 %v748, %v1097
    %v1099 = vpop.f32.mrb[0].mxu0
    %v1100 = vpop.f32.mrb[0].mxu0
    %v1101 = vadd.f32 %v753, %v1100
    %v1102 = vpop.f32.mrb[0].mxu0
    %1103 = vmatprep.mubr.bf16.mxu0 %v996
    %1104 = vmatmul.mubr.bf16.gmra.mrb[0].mxu0 %v995
    %v1105 = vpop.f32.mrb[0].mxu0
    %v1106 = vadd.f32 %v758, %v1105
    %v1107 = vpop.f32.mrb[0].mxu0
    %v1108 = vpop.f32.mrb[0].mxu0
    %v1109 = vadd.f32 %v763, %v1108
    %v1110 = vpop.f32.mrb[0].mxu0
    %1111 = vmatprep.mubr.bf16.mxu0 %v998
    %1112 = vmatmul.mubr.bf16.gmra.mrb[0].mxu0 %v997
    %v1113 = vpop.f32.mrb[0].mxu0
    %v1114 = vadd.f32 %v768, %v1113
    %v1115 = vpop.f32.mrb[0].mxu0
    %v1116 = vpop.f32.mrb[0].mxu0
    %v1117 = vadd.f32 %v773, %v1116
    %v1118 = vpop.f32.mrb[0].mxu0
    %1119 = vmatprep.mubr.bf16.mxu0 %v1000
    %1120 = vmatmul.mubr.bf16.gmra.mrb[0].mxu0 %v999
    %v1121 = vpop.f32.mrb[0].mxu0
    %v1122 = vadd.f32 %v778, %v1121
    %v1123 = vpop.f32.mrb[0].mxu0
    %v1124 = vpop.f32.mrb[0].mxu0
    %v1125 = vadd.f32 %v783, %v1124
    %v1126 = vpop.f32.mrb[0].mxu0
    %1127 = vmatprep.mubr.bf16.mxu0 %v1002
    %1128 = vmatmul.mubr.bf16.gmra.mrb[0].mxu0 %v1001
    %v1129 = vpop.f32.mrb[0].mxu0
    %v1130 = vadd.f32 %v788, %v1129
    %v1131 = vpop.f32.mrb[0].mxu0
    %v1132 = vpop.f32.mrb[0].mxu0
    %v1133 = vadd.f32 %v793, %v1132
    %v1134 = vpop.f32.mrb[0].mxu0
    %1135 = vmatprep.mubr.bf16.mxu0 %v1004
    %1136 = vmatmul.mubr.bf16.gmra.mrb[0].mxu0 %v1003
    %v1137 = vpop.f32.mrb[0].mxu0
    %v1138 = vadd.f32 %v798, %v1137
    %v1139 = vpop.f32.mrb[0].mxu0
    %v1140 = vpop.f32.mrb[0].mxu0
    %v1141 = vadd.f32 %v803, %v1140
    %v1142 = vpop.f32.mrb[0].mxu0
    %1143 = vmatprep.mubr.bf16.mxu0 %v1006
    %1144 = vmatmul.mubr.bf16.gmra.mrb[0].mxu0 %v1005
    %v1145 = vpop.f32.mrb[0].mxu0
    %v1146 = vadd.f32 %v808, %v1145
    %v1147 = vpop.f32.mrb[0].mxu0
    %v1148 = vpop.f32.mrb[0].mxu0
    %v1149 = vadd.f32 %v813, %v1148
    %v1150 = vpop.f32.mrb[0].mxu0
    %1151 = vmatprep.mubr.bf16.mxu0 %v1008
    %1152 = vmatmul.mubr.bf16.gmra.mrb[0].mxu0 %v1007
    %v1153 = vpop.f32.mrb[0].mxu0
    %v1154 = vadd.f32 %v818, %v1153
    %v1155 = vpop.f32.mrb[0].mxu0
    %v1156 = vpop.f32.mrb[0].mxu0
    %v1157 = vadd.f32 %v823, %v1156
    %v1158 = vpop.f32.mrb[0].mxu0
    %1159 = vmatprep.mubr.bf16.mxu0 %v1010
    %1160 = vmatmul.mubr.bf16.gmra.mrb[0].mxu0 %v1009
    %v1161 = vpop.f32.mrb[0].mxu0
    %v1162 = vadd.f32 %v828, %v1161
    %v1163 = vpop.f32.mrb[0].mxu0
    %v1164 = vpop.f32.mrb[0].mxu0
    %v1165 = vadd.f32 %v833, %v1164
    %v1166 = vpop.f32.mrb[0].mxu0
    %1167 = vmatprep.mubr.bf16.mxu0 %v1012
    %1168 = vmatmul.mubr.bf16.gmra.mrb[0].mxu0 %v1011
    %v1169 = vpop.f32.mrb[0].mxu0
    %v1170 = vadd.f32 %v838, %v1169
    %v1171 = vpop.f32.mrb[0].mxu0
    %v1172 = vpop.f32.mrb[0].mxu0
    %v1173 = vadd.f32 %v843, %v1172
    %v1174 = vpop.f32.mrb[0].mxu0
    %1175 = vmatprep.mubr.bf16.mxu0 %v1014
    %1176 = vmatmul.mubr.bf16.gmra.mrb[0].mxu0 %v1013
    %v1177 = vpop.f32.mrb[0].mxu0
    %v1178 = vadd.f32 %v848, %v1177
    %v1179 = vpop.f32.mrb[0].mxu0
    %v1180 = vpop.f32.mrb[0].mxu0
    %v1181 = vadd.f32 %v853, %v1180
    %v1182 = vpop.f32.mrb[0].mxu0
    %1183 = vmatprep.mubr.bf16.mxu0 %v1016
    %1184 = vmatmul.mubr.bf16.gmra.mrb[0].mxu0 %v1015
    %v1185 = vpop.f32.mrb[0].mxu0
    %v1186 = vadd.f32 %v858, %v1185
    %v1187 = vpop.f32.mrb[0].mxu0
    %v1188 = vpop.f32.mrb[0].mxu0
    %v1189 = vadd.f32 %v863, %v1188
    %v1190 = vpop.f32.mrb[0].mxu0
    %1191 = vmatprep.mubr.bf16.mxu0 %v1018
    %1192 = vmatmul.mubr.bf16.gmra.mrb[0].mxu0 %v1017
    %v1193 = vpop.f32.mrb[0].mxu0
    %v1194 = vadd.f32 %v868, %v1193
    %v1195 = vpop.f32.mrb[0].mxu0
    %v1196 = vpop.f32.mrb[0].mxu0
    %v1197 = vadd.f32 %v873, %v1196
    %v1198 = vpop.f32.mrb[0].mxu0
    %1199 = vmatprep.mubr.bf16.mxu0 %v1020
    %1200 = vmatmul.mubr.bf16.gmra.mrb[0].mxu0 %v1019
    %v1201 = vpop.f32.mrb[0].mxu0
    %v1202 = vadd.f32 %v878, %v1201
    %v1203 = vpop.f32.mrb[0].mxu0
    %v1204 = vpop.f32.mrb[0].mxu0
    %v1205 = vadd.f32 %v883, %v1204
    %v1206 = vpop.f32.mrb[0].mxu0
    %1207 = vmatprep.mubr.bf16.mxu0 %v1022
    %1208 = vmatmul.mubr.bf16.gmra.mrb[0].mxu0 %v1021
    %v1209 = vpop.f32.mrb[0].mxu0
    %v1210 = vadd.f32 %v888, %v1209
    %v1211 = vpop.f32.mrb[0].mxu0
    %v1212 = vpop.f32.mrb[0].mxu0
    %v1213 = vadd.f32 %v893, %v1212
    %v1214 = vpop.f32.mrb[0].mxu0
    %1215 = vdwg.mxu0
    %v1216 = vmax.f32 %v1090, 0.0
    %v1217 = vmax.f32 %v1093, 0.0
    %v1218 = vmax.f32 %v1098, 0.0
    %v1219 = vmax.f32 %v1101, 0.0
    %v1220 = vmax.f32 %v1106, 0.0
    %v1221 = vmax.f32 %v1109, 0.0
    %v1222 = vmax.f32 %v1114, 0.0
    %v1223 = vmax.f32 %v1117, 0.0
    %v1224 = vmax.f32 %v1122, 0.0
    %v1225 = vmax.f32 %v1125, 0.0
    %v1226 = vmax.f32 %v1130, 0.0
    %v1227 = vmax.f32 %v1133, 0.0
    %v1228 = vmax.f32 %v1138, 0.0
    %v1229 = vmax.f32 %v1141, 0.0
    %v1230 = vmax.f32 %v1146, 0.0
    %v1231 = vmax.f32 %v1149, 0.0
    %v1232 = vmax.f32 %v1154, 0.0
    %v1233 = vmax.f32 %v1157, 0.0
    %v1234 = vmax.f32 %v1162, 0.0
    %v1235 = vmax.f32 %v1165, 0.0
    %v1236 = vmax.f32 %v1170, 0.0
    %v1237 = vmax.f32 %v1173, 0.0
    %v1238 = vmax.f32 %v1178, 0.0
    %v1239 = vmax.f32 %v1181, 0.0
    %v1240 = vmax.f32 %v1186, 0.0
    %v1241 = vmax.f32 %v1189, 0.0
    %v1242 = vmax.f32 %v1194, 0.0
    %v1243 = vmax.f32 %v1197, 0.0
    %v1244 = vmax.f32 %v1202, 0.0
    %v1245 = vmax.f32 %v1205, 0.0
    %v1246 = vmax.f32 %v1210, 0.0
    %v1247 = vmax.f32 %v1213, 0.0
    %v1248 = vld [vmem:[%s5] sm:$0xff]
    %v1249 = vld [vmem:[%s5 + $0x8] sm:$0xff]
    %v1250 = vld [vmem:[%s5 + $0x10] sm:$0xff]
    %v1251 = vld [vmem:[%s5 + $0x18] sm:$0xff]
    %v1252 = vld [vmem:[%s5 + $0x20] sm:$0xff]
    %v1253 = vld [vmem:[%s5 + $0x28] sm:$0xff]
    %v1254 = vld [vmem:[%s5 + $0x30] sm:$0xff]
    %v1255 = vld [vmem:[%s5 + $0x38] sm:$0xff]
    %v1256 = vld [vmem:[%s5 + $0x40] sm:$0xff]
    %v1257 = vld [vmem:[%s5 + $0x48] sm:$0xff]
    %v1258 = vld [vmem:[%s5 + $0x50] sm:$0xff]
    %v1259 = vld [vmem:[%s5 + $0x58] sm:$0xff]
    %v1260 = vld [vmem:[%s5 + $0x60] sm:$0xff]
    %v1261 = vld [vmem:[%s5 + $0x68] sm:$0xff]
    %v1262 = vld [vmem:[%s5 + $0x70] sm:$0xff]
    %v1263 = vld [vmem:[%s5 + $0x78] sm:$0xff]
    %v1264 = vld [vmem:[%s5 + $0x80] sm:$0xff]
    %v1265 = vld [vmem:[%s5 + $0x88] sm:$0xff]
    %v1266 = vld [vmem:[%s5 + $0x90] sm:$0xff]
    %v1267 = vld [vmem:[%s5 + $0x98] sm:$0xff]
    %v1268 = vld [vmem:[%s5 + $0xa0] sm:$0xff]
    %v1269 = vld [vmem:[%s5 + $0xa8] sm:$0xff]
    %v1270 = vld [vmem:[%s5 + $0xb0] sm:$0xff]
    %v1271 = vld [vmem:[%s5 + $0xb8] sm:$0xff]
    %v1272 = vld [vmem:[%s5 + $0xc0] sm:$0xff]
    %v1273 = vld [vmem:[%s5 + $0xc8] sm:$0xff]
    %v1274 = vld [vmem:[%s5 + $0xd0] sm:$0xff]
    %v1275 = vld [vmem:[%s5 + $0xd8] sm:$0xff]
    %v1276 = vld [vmem:[%s5 + $0xe0] sm:$0xff]
    %v1277 = vld [vmem:[%s5 + $0xe8] sm:$0xff]
    %v1278 = vld [vmem:[%s5 + $0xf0] sm:$0xff]
    %v1279 = vld [vmem:[%s5 + $0xf8] sm:$0xff]
    %1281 = vset.pattern.permute.xlu0 0
    %1282 = vperm.xlu0 %1281, %v1248
    %v1283 = vpop.permute.xlu0 %1282
    %1286 = vset.pattern.permute.xlu0 0
    %1287 = vperm.xlu0 %1286, %v1249
    %v1288 = vpop.permute.xlu0 %1287
    %1291 = vset.pattern.permute.xlu0 0
    %1292 = vperm.xlu0 %1291, %v1250
    %v1293 = vpop.permute.xlu0 %1292
    %1296 = vset.pattern.permute.xlu0 0
    %1297 = vperm.xlu0 %1296, %v1251
    %v1298 = vpop.permute.xlu0 %1297
    %1301 = vset.pattern.permute.xlu0 0
    %1302 = vperm.xlu0 %1301, %v1252
    %v1303 = vpop.permute.xlu0 %1302
    %1306 = vset.pattern.permute.xlu0 0
    %1307 = vperm.xlu0 %1306, %v1253
    %v1308 = vpop.permute.xlu0 %1307
    %1311 = vset.pattern.permute.xlu0 0
    %1312 = vperm.xlu0 %1311, %v1254
    %v1313 = vpop.permute.xlu0 %1312
    %1316 = vset.pattern.permute.xlu0 0
    %1317 = vperm.xlu0 %1316, %v1255
    %v1318 = vpop.permute.xlu0 %1317
    %1321 = vset.pattern.permute.xlu0 0
    %1322 = vperm.xlu0 %1321, %v1256
    %v1323 = vpop.permute.xlu0 %1322
    %1326 = vset.pattern.permute.xlu0 0
    %1327 = vperm.xlu0 %1326, %v1257
    %v1328 = vpop.permute.xlu0 %1327
    %1331 = vset.pattern.permute.xlu0 0
    %1332 = vperm.xlu0 %1331, %v1258
    %v1333 = vpop.permute.xlu0 %1332
    %1336 = vset.pattern.permute.xlu0 0
    %1337 = vperm.xlu0 %1336, %v1259
    %v1338 = vpop.permute.xlu0 %1337
    %1341 = vset.pattern.permute.xlu0 0
    %1342 = vperm.xlu0 %1341, %v1260
    %v1343 = vpop.permute.xlu0 %1342
    %1346 = vset.pattern.permute.xlu0 0
    %1347 = vperm.xlu0 %1346, %v1261
    %v1348 = vpop.permute.xlu0 %1347
    %1351 = vset.pattern.permute.xlu0 0
    %1352 = vperm.xlu0 %1351, %v1262
    %v1353 = vpop.permute.xlu0 %1352
    %1356 = vset.pattern.permute.xlu0 0
    %1357 = vperm.xlu0 %1356, %v1263
    %v1358 = vpop.permute.xlu0 %1357
    %1361 = vset.pattern.permute.xlu0 0
    %1362 = vperm.xlu0 %1361, %v1264
    %v1363 = vpop.permute.xlu0 %1362
    %1366 = vset.pattern.permute.xlu0 0
    %1367 = vperm.xlu0 %1366, %v1265
    %v1368 = vpop.permute.xlu0 %1367
    %1371 = vset.pattern.permute.xlu0 0
    %1372 = vperm.xlu0 %1371, %v1266
    %v1373 = vpop.permute.xlu0 %1372
    %1376 = vset.pattern.permute.xlu0 0
    %1377 = vperm.xlu0 %1376, %v1267
    %v1378 = vpop.permute.xlu0 %1377
    %1381 = vset.pattern.permute.xlu0 0
    %1382 = vperm.xlu0 %1381, %v1268
    %v1383 = vpop.permute.xlu0 %1382
    %1386 = vset.pattern.permute.xlu0 0
    %1387 = vperm.xlu0 %1386, %v1269
    %v1388 = vpop.permute.xlu0 %1387
    %1391 = vset.pattern.permute.xlu0 0
    %1392 = vperm.xlu0 %1391, %v1270
    %v1393 = vpop.permute.xlu0 %1392
    %1396 = vset.pattern.permute.xlu0 0
    %1397 = vperm.xlu0 %1396, %v1271
    %v1398 = vpop.permute.xlu0 %1397
    %1401 = vset.pattern.permute.xlu0 0
    %1402 = vperm.xlu0 %1401, %v1272
    %v1403 = vpop.permute.xlu0 %1402
    %1406 = vset.pattern.permute.xlu0 0
    %1407 = vperm.xlu0 %1406, %v1273
    %v1408 = vpop.permute.xlu0 %1407
    %1411 = vset.pattern.permute.xlu0 0
    %1412 = vperm.xlu0 %1411, %v1274
    %v1413 = vpop.permute.xlu0 %1412
    %1416 = vset.pattern.permute.xlu0 0
    %1417 = vperm.xlu0 %1416, %v1275
    %v1418 = vpop.permute.xlu0 %1417
    %1421 = vset.pattern.permute.xlu0 0
    %1422 = vperm.xlu0 %1421, %v1276
    %v1423 = vpop.permute.xlu0 %1422
    %1426 = vset.pattern.permute.xlu0 0
    %1427 = vperm.xlu0 %1426, %v1277
    %v1428 = vpop.permute.xlu0 %1427
    %1431 = vset.pattern.permute.xlu0 0
    %1432 = vperm.xlu0 %1431, %v1278
    %v1433 = vpop.permute.xlu0 %1432
    %1436 = vset.pattern.permute.xlu0 0
    %1437 = vperm.xlu0 %1436, %v1279
    %v1438 = vpop.permute.xlu0 %1437
    %v1440 = vmul.f32 %v1216, %v1283
    %v1441 = vmul.f32 %v1217, %v1288
    %v1442 = vmul.f32 %v1218, %v1293
    %v1443 = vmul.f32 %v1219, %v1298
    %v1444 = vmul.f32 %v1220, %v1303
    %v1445 = vmul.f32 %v1221, %v1308
    %v1446 = vmul.f32 %v1222, %v1313
    %v1447 = vmul.f32 %v1223, %v1318
    %v1448 = vmul.f32 %v1224, %v1323
    %v1449 = vmul.f32 %v1225, %v1328
    %v1450 = vmul.f32 %v1226, %v1333
    %v1451 = vmul.f32 %v1227, %v1338
    %v1452 = vmul.f32 %v1228, %v1343
    %v1453 = vmul.f32 %v1229, %v1348
    %v1454 = vmul.f32 %v1230, %v1353
    %v1455 = vmul.f32 %v1231, %v1358
    %v1456 = vmul.f32 %v1232, %v1363
    %v1457 = vmul.f32 %v1233, %v1368
    %v1458 = vmul.f32 %v1234, %v1373
    %v1459 = vmul.f32 %v1235, %v1378
    %v1460 = vmul.f32 %v1236, %v1383
    %v1461 = vmul.f32 %v1237, %v1388
    %v1462 = vmul.f32 %v1238, %v1393
    %v1463 = vmul.f32 %v1239, %v1398
    %v1464 = vmul.f32 %v1240, %v1403
    %v1465 = vmul.f32 %v1241, %v1408
    %v1466 = vmul.f32 %v1242, %v1413
    %v1467 = vmul.f32 %v1243, %v1418
    %v1468 = vmul.f32 %v1244, %v1423
    %v1469 = vmul.f32 %v1245, %v1428
    %v1470 = vmul.f32 %v1246, %v1433
    %v1471 = vmul.f32 %v1247, %v1438
    %v1472 = vadd.f32 %v1440, %v1441
    %v1473 = vadd.f32 %v1472, %v1442
    %v1474 = vadd.f32 %v1473, %v1443
    %v1475 = vadd.f32 %v1474, %v1444
    %v1476 = vadd.f32 %v1475, %v1445
    %v1477 = vadd.f32 %v1476, %v1446
    %v1478 = vadd.f32 %v1477, %v1447
    %v1479 = vadd.f32 %v1478, %v1448
    %v1480 = vadd.f32 %v1479, %v1449
    %v1481 = vadd.f32 %v1480, %v1450
    %v1482 = vadd.f32 %v1481, %v1451
    %v1483 = vadd.f32 %v1482, %v1452
    %v1484 = vadd.f32 %v1483, %v1453
    %v1485 = vadd.f32 %v1484, %v1454
    %v1486 = vadd.f32 %v1485, %v1455
    %v1487 = vadd.f32 %v1486, %v1456
    %v1488 = vadd.f32 %v1487, %v1457
    %v1489 = vadd.f32 %v1488, %v1458
    %v1490 = vadd.f32 %v1489, %v1459
    %v1491 = vadd.f32 %v1490, %v1460
    %v1492 = vadd.f32 %v1491, %v1461
    %v1493 = vadd.f32 %v1492, %v1462
    %v1494 = vadd.f32 %v1493, %v1463
    %v1495 = vadd.f32 %v1494, %v1464
    %v1496 = vadd.f32 %v1495, %v1465
    %v1497 = vadd.f32 %v1496, %v1466
    %v1498 = vadd.f32 %v1497, %v1467
    %v1499 = vadd.f32 %v1498, %v1468
    %v1500 = vadd.f32 %v1499, %v1469
    %v1501 = vadd.f32 %v1500, %v1470
    %v1502 = vadd.f32 %v1501, %v1471
    %v1503 = vrot.slane %v1502, 4
    %v1504 = vadd.f32 %v1502, %v1503
    %v1505 = vrot.slane %v1504, 2
    %v1506 = vadd.f32 %v1504, %v1505
    %v1507 = vrot.slane %v1506, 1
    %v1508 = vadd.f32 %v1506, %v1507
    %s1509 = sld [smem:[#allocation2]]
    %v1510 = vstv %s1509
    %v1511 = vadd.f32 %v1508, %v1510
    %1512 = vst [vmem:[#allocation3] sm:$0x1] %v1511
    // Predicated region
    $region30: #{tpu_custom_call.1} parent=1 // pred_check
      _
    $region31: #{tpu_custom_call.1} parent=1 // pred_check_branch
      %1514 = sbr.rel (0) target = $region33
    $region32: #{tpu_custom_call.1} parent=1 // pred_region
      %s1516 = ssub.s32 16, 16
      %1517 = vsyncadd [#allocation4], %s1516
      %s1519 = sshll.u32 [#allocation3], 4
      %s1520 = int_to_ptr.vmem [resolvable:$true] %s1519
      %1522 = dma.vmem_to_hbm [thread:$0]  %s1520, 16, %s7, [#allocation4]
    $region33: #{tpu_custom_call.1} parent=1 // pred_fallthru
      _
    // Predicated region
    $region34: #{tpu_custom_call.1} parent=1 // pred_check
      _
    $region35: #{tpu_custom_call.1} parent=1 // pred_check_branch
      %1524 = sbr.rel (0) target = $region37
    $region36: #{tpu_custom_call.1} parent=1 // pred_region
      %1525 = dma.done [#allocation4], 16
    $region37: #{tpu_custom_call.1} parent=1 // pred_fallthru
      _
    %1526 = vsyncpa [#allocation4], 1

</llo_original>
